<compile_context>
chip_gen: v7x
topology: tpu7x:2x2x1
jax: 0.10.0
libtpu: 0.0.40
codegen_flags: <defaults>
</compile_context>

<pallas_src>
import jax
import jax.numpy as jnp
from jax.experimental import pallas as pl
from jax.experimental.pallas import tpu as pltpu


def _round_up(x, m):
    return ((x + m - 1) // m) * m


def qnet_kernel(xT_ref, w1t_ref, b1_ref, w2t_ref, b2_ref, w3_ref, b3_ref, o_ref):
    # Layer 1 (feature-major): h1 = relu(W1^T @ x^T + b1)   -> (H, TB), f32
    h1 = jnp.dot(w1t_ref[...], xT_ref[...], preferred_element_type=jnp.float32)
    h1 = jnp.maximum(h1 + b1_ref[...], 0.0)

    # Layer 2: h2 = relu(W2^T @ h1 + b2).  Matmul operands in W2's dtype (bf16 by
    # default -> native MXU input); accumulate + elementwise in f32.
    h2 = jnp.dot(w2t_ref[...], h1.astype(w2t_ref.dtype),
                 preferred_element_type=jnp.float32)
    h2 = jnp.maximum(h2 + b2_ref[...], 0.0)

    # Layer 3 (H -> 1): VPU multiply + sublane reduce (keepdims) -> lane-dense
    # (1, TB) row, no MXU pass and no sublane->lane relayout needed.
    v = jnp.sum(h2 * w3_ref[...], axis=0, keepdims=True)
    o_ref[...] = v + b3_ref[...]


def _choose_batch_tile(batch, block_b):
    """Pick the batch (lane-axis) tile: big tiles, but >=2 grid steps for
    moderate B so v7x's two TensorCores both get work."""
    assert block_b % 128 == 0, "block_b must be a multiple of 128"
    if batch <= 128:
        return 128                                   # one tiny tile
    if batch <= 2 * block_b:
        return _round_up(-(-batch // 2), 128)        # exactly 2 tiles
    return block_b


def qnet_forward(state, action, params, *, block_b=1024, matmul_dtype=jnp.bfloat16):
    """Pallas-backed QNet forward.

    state: (B, nStates), action: (B, nActions) -> (B, 1) float32.
    """
    w1, b1, w2, b2, w3, b3 = params
    B, n_states = state.shape
    n_actions = action.shape[1]
    hidden = w1.shape[1]
    n_feat = n_states + n_actions
    f_pad = _round_up(n_feat, 8)

    tb = _choose_batch_tile(B, block_b)
    b_pad = _round_up(B, tb)
    grid = (b_pad // tb,)

    # Pack state+action once in the wrapper (tiny HBM op), transpose to
    # feature-major, zero-pad features to f_pad and batch to b_pad.
    x = jnp.concatenate([state, action], axis=1).astype(jnp.float32)       # (B, F)
    xT = jnp.pad(x.T, ((0, f_pad - n_feat), (0, b_pad - B)))               # (F_pad, B_pad)

    # Trace-time weight prep (transposed layouts, zero-padded W1^T, bf16 W2^T).
    w1t = jnp.pad(w1.astype(jnp.float32).T, ((0, 0), (0, f_pad - n_feat)))  # (H, F_pad)
    b1c = b1.reshape(hidden, 1).astype(jnp.float32)
    w2t = w2.astype(jnp.float32).T.astype(matmul_dtype)                     # (H, H)
    b2c = b2.reshape(hidden, 1).astype(jnp.float32)
    w3c = w3.reshape(hidden, 1).astype(jnp.float32)
    b3s = b3.reshape(1, 1).astype(jnp.float32)

    def stream_spec(shape):   # streamed over the batch (lane) grid axis
        return pl.BlockSpec(shape, lambda i: (0, i))

    def resident(arr):        # whole-array block, constant index, single-buffered
        return pl.BlockSpec(arr.shape, lambda i: (0, 0),
                            pipeline_mode=pl.Buffered(1))

    # Explicit VMEM budget: single-buffered residents + double-buffered
    # input/output tiles + the two (H, TB) f32 intermediates (+ bf16 copy).
    resident_bytes = sum(int(a.size) * a.dtype.itemsize
                         for a in (w1t, b1c, w2t, b2c, w3c, b3s))
    stream_bytes = 2 * (f_pad * tb * 4 + tb * 4)
    interm_bytes = 3 * hidden * tb * 4
    vmem_limit = int(min(100 * 2**20,
                         max(16 * 2**20,
                             2 * (resident_bytes + stream_bytes + interm_bytes))))

    out = pl.pallas_call(
        qnet_kernel,
        out_shape=jax.ShapeDtypeStruct((1, b_pad), jnp.float32),
        grid=grid,
        in_specs=[
            stream_spec((f_pad, tb)),   # x^T tile (features on sublanes, batch on lanes)
            resident(w1t),
            resident(b1c),
            resident(w2t),
            resident(b2c),
            resident(w3c),
            resident(b3s),
        ],
        out_specs=pl.BlockSpec((1, tb), lambda i: (0, i)),
        compiler_params=pltpu.CompilerParams(
            dimension_semantics=("parallel",),      # v7x: batch tiles across 2 TCs
            vmem_limit_bytes=vmem_limit),
    )(xT, w1t, b1c, w2t, b2c, w3c, b3s)

    # Back to the module's (B, 1) layout (cheap slice + reshape of a tiny row).
    return out[0, :B].reshape(B, 1)


def init_qnet_params(key, n_states, n_actions, qnet_size):
    """Deterministic PyTorch-Linear-style init (uniform in +/- 1/sqrt(fan_in))."""
    def linear_init(k, fan_in, fan_out):
        kw, kb = jax.random.split(k)
        bound = 1.0 / jnp.sqrt(jnp.float32(fan_in))
        w = jax.random.uniform(kw, (fan_in, fan_out), jnp.float32, -bound, bound)
        b = jax.random.uniform(kb, (1, fan_out), jnp.float32, -bound, bound)
        return w, b

    k1, k2, k3 = jax.random.split(key, 3)
    w1, b1 = linear_init(k1, n_states + n_actions, qnet_size)
    w2, b2 = linear_init(k2, qnet_size, qnet_size)
    w3, b3 = linear_init(k3, qnet_size, 1)
    return (w1, b1, w2, b2, w3, b3)


def qnet_reference(state, action, params):
    """Pure-JAX f32 reference (concat formulation, faithful to the PyTorch module)."""
    w1, b1, w2, b2, w3, b3 = params
    x = jnp.concatenate([state, action], axis=1).astype(jnp.float32)
    h = jnp.maximum(x @ w1 + b1, 0.0)
    h = jnp.maximum(h @ w2 + b2, 0.0)
    return h @ w3 + b3


if __name__ == "__main__":
    # Small shapes consistent with the module: B=8, nStates=4, nActions=2, qNet_size=32.
    B, N_STATES, N_ACTIONS, QNET_SIZE = 8, 4, 2, 32

    key = jax.random.PRNGKey(0)
    k_params, k_state, k_action = jax.random.split(key, 3)

    params = init_qnet_params(k_params, N_STATES, N_ACTIONS, QNET_SIZE)
    state = jax.random.normal(k_state, (B, N_STATES), jnp.float32)
    action = jax.random.normal(k_action, (B, N_ACTIONS), jnp.float32)

    q_ref = qnet_reference(state, action, params)

    # Exact-f32 path: structural correctness, tight tolerance.
    qnet_f32 = jax.jit(lambda s, a: qnet_forward(s, a, params, matmul_dtype=jnp.float32))
    q_f32 = jax.block_until_ready(qnet_f32(state, action))
    assert q_f32.shape == (B, 1), q_f32.shape
    err_f32 = float(jnp.max(jnp.abs(q_f32 - q_ref)))
    assert jnp.allclose(q_f32, q_ref, atol=1e-4, rtol=1e-4), f"f32 mismatch: {err_f32}"

    # Default path (bf16 layer-2 MXU operands, f32 accumulation): loose tolerance.
    qnet_bf16 = jax.jit(lambda s, a: qnet_forward(s, a, params))
    q_bf16 = jax.block_until_ready(qnet_bf16(state, action))
    assert q_bf16.shape == (B, 1), q_bf16.shape
    err_bf16 = float(jnp.max(jnp.abs(q_bf16 - q_ref)))
    assert jnp.allclose(q_bf16, q_ref, atol=5e-2, rtol=5e-2), f"bf16 mismatch: {err_bf16}"

    print("KERNEL_OK")
</pallas_src>

<mosaic_0001>
module attributes {stable_mosaic.version = 11 : i64} {
  func.func @qnet_kernel(%arg0: i32, %arg1: memref<8x128xf32, #tpu.memory_space<vmem>>, %arg2: memref<32x8xf32, #tpu.memory_space<vmem>>, %arg3: memref<32x1xf32, #tpu.memory_space<vmem>>, %arg4: memref<32x32xf32, #tpu.memory_space<vmem>>, %arg5: memref<32x1xf32, #tpu.memory_space<vmem>>, %arg6: memref<32x1xf32, #tpu.memory_space<vmem>>, %arg7: memref<1x1xf32, #tpu.memory_space<vmem>>, %arg8: memref<1x128xf32, #tpu.memory_space<vmem>>) attributes {dimension_semantics = [#tpu.dimension_semantics<parallel>], iteration_bounds = array<i64: 1>, scalar_prefetch = 0 : i64, scratch_operands = 0 : i64, tpu.core_type = #tpu.core_type<tc>, window_params = [{transform_indices = @transform_0, window_bounds = array<i64: 8, 128>}, {pipeline_mode = #tpu.pipeline_mode<synchronous>, transform_indices = @transform_1, window_bounds = array<i64: 32, 8>}, {pipeline_mode = #tpu.pipeline_mode<synchronous>, transform_indices = @transform_2, window_bounds = array<i64: 32, 1>}, {pipeline_mode = #tpu.pipeline_mode<synchronous>, transform_indices = @transform_3, window_bounds = array<i64: 32, 32>}, {pipeline_mode = #tpu.pipeline_mode<synchronous>, transform_indices = @transform_4, window_bounds = array<i64: 32, 1>}, {pipeline_mode = #tpu.pipeline_mode<synchronous>, transform_indices = @transform_5, window_bounds = array<i64: 32, 1>}, {pipeline_mode = #tpu.pipeline_mode<synchronous>, transform_indices = @transform_6, window_bounds = array<i64: 1, 1>}, {transform_indices = @transform_7, window_bounds = array<i64: 1, 128>}]} {
    %c0 = arith.constant 0 : index
    %c0_0 = arith.constant 0 : index
    %0 = vector.load %arg2[%c0, %c0_0] : memref<32x8xf32, #tpu.memory_space<vmem>>, vector<32x8xf32>
    %c0_1 = arith.constant 0 : index
    %c0_2 = arith.constant 0 : index
    %1 = vector.load %arg1[%c0_1, %c0_2] : memref<8x128xf32, #tpu.memory_space<vmem>>, vector<8x128xf32>
    %cst = arith.constant dense<0.000000e+00> : vector<32x128xf32>
    %2 = tpu.matmul %0, %1, %cst {dimension_numbers = #tpu.dot_dimension_numbers<[1], [0], [0], [1], [0, 0, 1, 1], [], []>} : vector<32x8xf32>, vector<8x128xf32>, vector<32x128xf32> -> vector<32x128xf32>
    %c0_3 = arith.constant 0 : index
    %c0_4 = arith.constant 0 : index
    %3 = vector.load %arg3[%c0_3, %c0_4] : memref<32x1xf32, #tpu.memory_space<vmem>>, vector<32x1xf32>
    %4 = vector.broadcast %3 : vector<32x1xf32> to vector<32x128xf32>
    %5 = arith.addf %2, %4 : vector<32x128xf32>
    %cst_5 = arith.constant 0.000000e+00 : f32
    %6 = vector.broadcast %cst_5 : f32 to vector<32x128xf32>
    %7 = arith.maximumf %5, %6 : vector<32x128xf32>
    %c0_6 = arith.constant 0 : index
    %c0_7 = arith.constant 0 : index
    %8 = vector.load %arg4[%c0_6, %c0_7] : memref<32x32xf32, #tpu.memory_space<vmem>>, vector<32x32xf32>
    %cst_8 = arith.constant dense<0.000000e+00> : vector<32x128xf32>
    %9 = tpu.matmul %8, %7, %cst_8 {dimension_numbers = #tpu.dot_dimension_numbers<[1], [0], [0], [1], [0, 0, 1, 1], [], []>} : vector<32x32xf32>, vector<32x128xf32>, vector<32x128xf32> -> vector<32x128xf32>
    %c0_9 = arith.constant 0 : index
    %c0_10 = arith.constant 0 : index
    %10 = vector.load %arg5[%c0_9, %c0_10] : memref<32x1xf32, #tpu.memory_space<vmem>>, vector<32x1xf32>
    %11 = vector.broadcast %10 : vector<32x1xf32> to vector<32x128xf32>
    %12 = arith.addf %9, %11 : vector<32x128xf32>
    %cst_11 = arith.constant 0.000000e+00 : f32
    %13 = vector.broadcast %cst_11 : f32 to vector<32x128xf32>
    %14 = arith.maximumf %12, %13 : vector<32x128xf32>
    %c0_12 = arith.constant 0 : index
    %c0_13 = arith.constant 0 : index
    %15 = vector.load %arg6[%c0_12, %c0_13] : memref<32x1xf32, #tpu.memory_space<vmem>>, vector<32x1xf32>
    %16 = vector.broadcast %15 : vector<32x1xf32> to vector<32x128xf32>
    %17 = arith.mulf %14, %16 : vector<32x128xf32>
    %cst_14 = arith.constant dense<0.000000e+00> : vector<128xf32>
    %18 = vector.multi_reduction <add>, %17, %cst_14 [0] : vector<32x128xf32> to vector<128xf32>
    %19 = vector.shape_cast %18 : vector<128xf32> to vector<1x128xf32>
    %c0_15 = arith.constant 0 : index
    %c0_16 = arith.constant 0 : index
    %20 = vector.load %arg7[%c0_15, %c0_16] : memref<1x1xf32, #tpu.memory_space<vmem>>, vector<1x1xf32>
    %21 = vector.broadcast %20 : vector<1x1xf32> to vector<1x128xf32>
    %22 = arith.addf %19, %21 : vector<1x128xf32>
    %c0_17 = arith.constant 0 : index
    %c0_18 = arith.constant 0 : index
    %23 = vector.load %arg8[%c0_17, %c0_18] : memref<1x128xf32, #tpu.memory_space<vmem>>, vector<1x128xf32>
    tpu.vector_store %arg8[%c0_17, %c0_18], %22 {strides = array<i32>} : memref<1x128xf32, #tpu.memory_space<vmem>>, vector<1x128xf32>,
    return
  }
  func.func @transform_0(%arg0: i32) -> (i32, i32) {
    %c0_i32 = arith.constant 0 : i32
    %c0_i32_0 = arith.constant 0 : i32
    return %c0_i32, %arg0 : i32, i32
  }
  func.func @transform_1(%arg0: i32) -> (i32, i32) {
    %c0_i32 = arith.constant 0 : i32
    %c0_i32_0 = arith.constant 0 : i32
    %c0_i32_1 = arith.constant 0 : i32
    return %c0_i32, %c0_i32_0 : i32, i32
  }
  func.func @transform_2(%arg0: i32) -> (i32, i32) {
    %c0_i32 = arith.constant 0 : i32
    %c0_i32_0 = arith.constant 0 : i32
    %c0_i32_1 = arith.constant 0 : i32
    return %c0_i32, %c0_i32_0 : i32, i32
  }
  func.func @transform_3(%arg0: i32) -> (i32, i32) {
    %c0_i32 = arith.constant 0 : i32
    %c0_i32_0 = arith.constant 0 : i32
    %c0_i32_1 = arith.constant 0 : i32
    return %c0_i32, %c0_i32_0 : i32, i32
  }
  func.func @transform_4(%arg0: i32) -> (i32, i32) {
    %c0_i32 = arith.constant 0 : i32
    %c0_i32_0 = arith.constant 0 : i32
    %c0_i32_1 = arith.constant 0 : i32
    return %c0_i32, %c0_i32_0 : i32, i32
  }
  func.func @transform_5(%arg0: i32) -> (i32, i32) {
    %c0_i32 = arith.constant 0 : i32
    %c0_i32_0 = arith.constant 0 : i32
    %c0_i32_1 = arith.constant 0 : i32
    return %c0_i32, %c0_i32_0 : i32, i32
  }
  func.func @transform_6(%arg0: i32) -> (i32, i32) {
    %c0_i32 = arith.constant 0 : i32
    %c0_i32_0 = arith.constant 0 : i32
    %c0_i32_1 = arith.constant 0 : i32
    return %c0_i32, %c0_i32_0 : i32, i32
  }
  func.func @transform_7(%arg0: i32) -> (i32, i32) {
    %c0_i32 = arith.constant 0 : i32
    %c0_i32_0 = arith.constant 0 : i32
    return %c0_i32, %arg0 : i32, i32
  }
}

</mosaic_0001>

<llo_original>
// kernel: _lambda_.1
$region0: #{_lambda_.1}
  #allocation0 [shape = 'u32[]', space=smem, size = 0x4, offset = 0x4, fixed_abs, tag = 'smem constant byte address 0x4 - core index']
  #allocation1 [shape = 'u32[144,128]{1,0:T(1,128)}', space=vmem, size = 0x12000, scoped, tag = 'internal scratch']
  #allocation2 [shape = 'f32[1,1]{1,0:T(1,128)S(1)}', space=vmem, size = 0x200, scoped, tag = 'scoped memory for _lambda_.1']
  %s0 = inlined_call_operand.vmem [shape: f32[8,128], index: 0, kind: input, shape index: {}]
  %s1 = inlined_call_operand.vmem [shape: f32[32,8], index: 1, kind: input, shape index: {}]
  %s2 = inlined_call_operand.hbm [shape: f32[32,1], index: 2, kind: input, shape index: {}]
  %s3 = inlined_call_operand.hbm [shape: f32[32,32], index: 3, kind: input, shape index: {}]
  %s4 = inlined_call_operand.hbm [shape: f32[32,1], index: 4, kind: input, shape index: {}]
  %s5 = inlined_call_operand.hbm [shape: f32[32,1], index: 5, kind: input, shape index: {}]
  %s6 = inlined_call_operand.<no memory space> [shape: f32[1,1], index: 6, kind: input, shape index: {}]
  %s7 = inlined_call_operand.vmem [shape: f32[1,128], index: 7, kind: output, shape index: {}]
  %s8 = sld [smem:[#allocation0]]
  $region54: #{_lambda_.1} parent=0
    _
  %s10 = ssub.s32 1, %s8
  %s11 = scalar_select 0, %s10, %s8
  %v12 = vstv %s6
  %13 = vst [vmem:[#allocation2] sm:$0x1] %v12
  $region1: #{_lambda_.1} parent=0
    #allocation3 [shape = 'u8[16384]{0}', space=vmem, size = 0x4000, scoped, tag = 'input window, operand 2, single buffered']
    #allocation4 [shape = 's32[1]{0}', space=sflag, size = 0x4, scoped, tag = 'scoped memory for _lambda_.1']
    #allocation5 [shape = 'u8[16384]{0}', space=vmem, size = 0x4000, scoped, tag = 'input window, operand 3, single buffered']
    #allocation6 [shape = 's32[1]{0}', space=sflag, size = 0x4, scoped, tag = 'scoped memory for _lambda_.1']
    #allocation7 [shape = 'u8[16384]{0}', space=vmem, size = 0x4000, scoped, tag = 'input window, operand 4, single buffered']
    #allocation8 [shape = 'u8[16384]{0}', space=vmem, size = 0x4000, scoped, tag = 'input window, operand 5, single buffered']
    #allocation9 [shape = 's32[1]{0}', space=sflag, size = 0x4, scoped, tag = 'scoped memory for _lambda_.1']
    %14 = vsyncpa [#allocation4], 0
    %15 = vsyncpa [#allocation6], 0
    %16 = vsyncpa [#allocation9], 0
    // Predicated region
    $region2: #{_lambda_.1} parent=1 // pred_check
      _
    $region3: #{_lambda_.1} parent=1 // pred_check_branch
      %18 = sbr.rel (0) target = $region5
    $region4: #{_lambda_.1} parent=1 // pred_region
      _
    $region5: #{_lambda_.1} parent=1 // pred_fallthru
      _
    // Predicated region
    $region6: #{_lambda_.1} parent=1 // pred_check
      _
    $region7: #{_lambda_.1} parent=1 // pred_check_branch
      %20 = sbr.rel (0) target = $region9
    $region8: #{_lambda_.1} parent=1 // pred_region
      _
    $region9: #{_lambda_.1} parent=1 // pred_fallthru
      _
    // Predicated region
    $region10: #{_lambda_.1} parent=1 // pred_check
      _
    $region11: #{_lambda_.1} parent=1 // pred_check_branch
      %22 = sbr.rel (0) target = $region13
    $region12: #{_lambda_.1} parent=1 // pred_region
      %s24 = ssub.s32 512, 512
      %25 = vsyncadd [#allocation4], %s24
      %s26 = sshll.u32 [#allocation3], 4
      %s27 = int_to_ptr.vmem [resolvable:$true] %s26
      %32 = dma.hbm_to_vmem [thread:$0]  %s2, 512, %s27, [#allocation4], 128, 128, 8
    $region13: #{_lambda_.1} parent=1 // pred_fallthru
      _
    // Predicated region
    $region14: #{_lambda_.1} parent=1 // pred_check
      _
    $region15: #{_lambda_.1} parent=1 // pred_check_branch
      %34 = sbr.rel (0) target = $region17
    $region16: #{_lambda_.1} parent=1 // pred_region
      %s36 = ssub.s32 512, 512
      %37 = vsyncadd [#allocation6], %s36
      %s38 = sshll.u32 [#allocation5], 4
      %s39 = int_to_ptr.vmem [resolvable:$true] %s38
      %44 = dma.hbm_to_vmem [thread:$0]  %s3, 512, %s39, [#allocation6], 128, 128, 8
    $region17: #{_lambda_.1} parent=1 // pred_fallthru
      _
    // Predicated region
    $region18: #{_lambda_.1} parent=1 // pred_check
      _
    $region19: #{_lambda_.1} parent=1 // pred_check_branch
      %46 = sbr.rel (0) target = $region21
    $region20: #{_lambda_.1} parent=1 // pred_region
      %s48 = ssub.s32 512, 512
      %49 = vsyncadd [#allocation6], %s48
      %s50 = sshll.u32 [#allocation7], 4
      %s51 = int_to_ptr.vmem [resolvable:$true] %s50
      %56 = dma.hbm_to_vmem [thread:$0]  %s4, 512, %s51, [#allocation6], 128, 128, 8
    $region21: #{_lambda_.1} parent=1 // pred_fallthru
      _
    // Predicated region
    $region22: #{_lambda_.1} parent=1 // pred_check
      _
    $region23: #{_lambda_.1} parent=1 // pred_check_branch
      %58 = sbr.rel (0) target = $region25
    $region24: #{_lambda_.1} parent=1 // pred_region
      %s60 = ssub.s32 512, 512
      %61 = vsyncadd [#allocation9], %s60
      %s62 = sshll.u32 [#allocation8], 4
      %s63 = int_to_ptr.vmem [resolvable:$true] %s62
      %68 = dma.hbm_to_vmem [thread:$0]  %s5, 512, %s63, [#allocation9], 128, 128, 8
    $region25: #{_lambda_.1} parent=1 // pred_fallthru
      _
    // Predicated region
    $region26: #{_lambda_.1} parent=1 // pred_check
      _
    $region27: #{_lambda_.1} parent=1 // pred_check_branch
      %70 = sbr.rel (0) target = $region29
    $region28: #{_lambda_.1} parent=1 // pred_region
      _
    $region29: #{_lambda_.1} parent=1 // pred_fallthru
      _
    // Predicated region
    $region30: #{_lambda_.1} parent=1 // pred_check
      _
    $region31: #{_lambda_.1} parent=1 // pred_check_branch
      %72 = sbr.rel (0) target = $region33
    $region32: #{_lambda_.1} parent=1 // pred_region
      %73 = dma.done [#allocation4], 512
    $region33: #{_lambda_.1} parent=1 // pred_fallthru
      _
    // Predicated region
    $region34: #{_lambda_.1} parent=1 // pred_check
      _
    $region35: #{_lambda_.1} parent=1 // pred_check_branch
      %75 = sbr.rel (0) target = $region37
    $region36: #{_lambda_.1} parent=1 // pred_region
      %76 = dma.done [#allocation6], 512
    $region37: #{_lambda_.1} parent=1 // pred_fallthru
      _
    // Predicated region
    $region38: #{_lambda_.1} parent=1 // pred_check
      _
    $region39: #{_lambda_.1} parent=1 // pred_check_branch
      %78 = sbr.rel (0) target = $region41
    $region40: #{_lambda_.1} parent=1 // pred_region
      %79 = dma.done [#allocation6], 512
    $region41: #{_lambda_.1} parent=1 // pred_fallthru
      _
    // Predicated region
    $region42: #{_lambda_.1} parent=1 // pred_check
      _
    $region43: #{_lambda_.1} parent=1 // pred_check_branch
      %81 = sbr.rel (0) target = $region45
    $region44: #{_lambda_.1} parent=1 // pred_region
      %82 = dma.done [#allocation9], 512
    $region45: #{_lambda_.1} parent=1 // pred_fallthru
      _
    %v83 = vld [vmem:[%s1] sm:$0xff]
    %v84 = vld [vmem:[%s1 + $0x8] sm:$0xff]
    %v85 = vld [vmem:[%s1 + $0x10] sm:$0xff]
    %v86 = vld [vmem:[%s1 + $0x18] sm:$0xff]
    %v87 = vld [vmem:[%s0] sm:$0xff]
    %v88 = vld [vmem:[#allocation3] sm:$0xff]
    %v89 = vld [vmem:[#allocation3 + $0x8] sm:$0xff]
    %v90 = vld [vmem:[#allocation3 + $0x10] sm:$0xff]
    %v91 = vld [vmem:[#allocation3 + $0x18] sm:$0xff]
    %93 = vset.pattern.permute.xlu0 0
    %94 = vperm.xlu0 %93, %v88
    %v95 = vpop.permute.xlu0 %94
    %98 = vset.pattern.permute.xlu0 0
    %99 = vperm.xlu0 %98, %v89
    %v100 = vpop.permute.xlu0 %99
    %103 = vset.pattern.permute.xlu0 0
    %104 = vperm.xlu0 %103, %v90
    %v105 = vpop.permute.xlu0 %104
    %108 = vset.pattern.permute.xlu0 0
    %109 = vperm.xlu0 %108, %v91
    %v110 = vpop.permute.xlu0 %109
    %vm112 = vcmask 64512
    %v114 = vsel %vm112, %v83, 0
    %v117 = vsel %vm112, %v84, 0
    %v120 = vsel %vm112, %v85, 0
    %v123 = vsel %vm112, %v86, 0
    %125 = vmatprep.subr.mxu0 0.0
    %126 = vmatpush1.msra.mxu0 %v87
    %127 = vmatprep.subr.mxu0 0.0
    %128 = vmatpush1.msra.mxu0 0.0
    %129 = vmatprep.subr.mxu0 0.0
    %130 = vmatpush1.msra.mxu0 0.0
    %131 = vmatprep.subr.mxu0 0.0
    %132 = vmatpush1.msra.mxu0 0.0
    %133 = vmatprep.subr.mxu0 0.0
    %134 = vmatpush1.msra.mxu0 0.0
    %135 = vmatprep.subr.mxu0 0.0
    %136 = vmatpush1.msra.mxu0 0.0
    %137 = vmatprep.subr.mxu0 0.0
    %138 = vmatpush1.msra.mxu0 0.0
    %139 = vmatprep.subr.mxu0 0.0
    %140 = vmatpush1.msra.mxu0 0.0
    %141 = vmatprep.subr.mxu0 0.0
    %142 = vmatpush1.msra.mxu0 0.0
    %143 = vmatprep.subr.mxu0 0.0
    %144 = vmatpush1.msra.mxu0 0.0
    %145 = vmatprep.subr.mxu0 0.0
    %146 = vmatpush1.msra.mxu0 0.0
    %147 = vmatprep.subr.mxu0 0.0
    %148 = vmatpush1.msra.mxu0 0.0
    %149 = vmatprep.subr.mxu0 0.0
    %150 = vmatpush1.msra.mxu0 0.0
    %151 = vmatprep.subr.mxu0 0.0
    %152 = vmatpush1.msra.mxu0 0.0
    %153 = vmatprep.subr.mxu0 0.0
    %154 = vmatpush1.msra.mxu0 0.0
    %155 = vmatprep.subr.mxu0 0.0
    %156 = vmatpush1.msra.mxu0 0.0
    %157 = vmatprep.subr.mxu0 0.0
    %158 = vmatpush1.msra.mxu0 0.0
    %159 = vmatprep.subr.mxu0 0.0
    %160 = vmatpush1.msra.mxu0 0.0
    %161 = vmatprep.subr.mxu0 0.0
    %162 = vmatpush1.msra.mxu0 0.0
    %163 = vmatprep.subr.mxu0 0.0
    %164 = vmatpush1.msra.mxu0 0.0
    %165 = vmatprep.subr.mxu0 0.0
    %166 = vmatpush1.msra.mxu0 0.0
    %167 = vmatprep.subr.mxu0 0.0
    %168 = vmatpush1.msra.mxu0 0.0
    %169 = vmatprep.subr.mxu0 0.0
    %170 = vmatpush1.msra.mxu0 0.0
    %171 = vmatprep.subr.mxu0 0.0
    %172 = vmatpush1.msra.mxu0 0.0
    %173 = vmatprep.subr.mxu0 0.0
    %174 = vmatpush1.msra.mxu0 0.0
    %175 = vmatprep.subr.mxu0 0.0
    %176 = vmatpush1.msra.mxu0 0.0
    %177 = vmatprep.subr.mxu0 0.0
    %178 = vmatpush1.msra.mxu0 0.0
    %179 = vmatprep.subr.mxu0 0.0
    %180 = vmatpush1.msra.mxu0 0.0
    %181 = vmatprep.subr.mxu0 0.0
    %182 = vmatpush1.msra.mxu0 0.0
    %183 = vmatprep.subr.mxu0 0.0
    %184 = vmatpush1.msra.mxu0 0.0
    %185 = vmatprep.subr.mxu0 0.0
    %186 = vmatpush1.msra.mxu0 0.0
    %187 = vmatprep.subr.mxu0 0.0
    %188 = vmatpush1.msra.mxu0 0.0
    %189 = vmatprep.mubr.f32.mxu0 0.0
    %190 = vmatmul.mubr.f32.gmra.mrb[0].mxu0 %v114
    %v191 = vpop.f32.mrb[0].mxu0
    %v192 = vadd.f32 %v95, %v191
    %v193 = vpop.f32.mrb[0].mxu0
    %194 = vmatprep.mubr.f32.mxu0 0.0
    %195 = vmatmul.mubr.f32.gmra.mrb[0].mxu0 %v117
    %v196 = vpop.f32.mrb[0].mxu0
    %v197 = vadd.f32 %v100, %v196
    %v198 = vpop.f32.mrb[0].mxu0
    %199 = vmatprep.mubr.f32.mxu0 0.0
    %200 = vmatmul.mubr.f32.gmra.mrb[0].mxu0 %v120
    %v201 = vpop.f32.mrb[0].mxu0
    %v202 = vadd.f32 %v105, %v201
    %v203 = vpop.f32.mrb[0].mxu0
    %204 = vmatprep.mubr.f32.mxu0 0.0
    %205 = vmatmul.mubr.f32.gmra.mrb[0].mxu0 %v123
    %v206 = vpop.f32.mrb[0].mxu0
    %v207 = vadd.f32 %v110, %v206
    %v208 = vpop.f32.mrb[0].mxu0
    %209 = vdwg.mxu0
    %v210 = vmax.f32 %v192, 0.0
    %v211 = vmax.f32 %v197, 0.0
    %v212 = vmax.f32 %v202, 0.0
    %v213 = vmax.f32 %v207, 0.0
    %v214 = vld [vmem:[#allocation5] sm:$0xff]
    %v215 = vld [vmem:[#allocation5 + $0x8] sm:$0xff]
    %v216 = vld [vmem:[#allocation5 + $0x10] sm:$0xff]
    %v217 = vld [vmem:[#allocation5 + $0x18] sm:$0xff]
    %v218 = vld [vmem:[#allocation7] sm:$0xff]
    %v219 = vld [vmem:[#allocation7 + $0x8] sm:$0xff]
    %v220 = vld [vmem:[#allocation7 + $0x10] sm:$0xff]
    %v221 = vld [vmem:[#allocation7 + $0x18] sm:$0xff]
    %223 = vset.pattern.permute.xlu0 0
    %224 = vperm.xlu0 %223, %v218
    %v225 = vpop.permute.xlu0 %224
    %228 = vset.pattern.permute.xlu0 0
    %229 = vperm.xlu0 %228, %v219
    %v230 = vpop.permute.xlu0 %229
    %233 = vset.pattern.permute.xlu0 0
    %234 = vperm.xlu0 %233, %v220
    %v235 = vpop.permute.xlu0 %234
    %238 = vset.pattern.permute.xlu0 0
    %239 = vperm.xlu0 %238, %v221
    %v240 = vpop.permute.xlu0 %239
    %vm242 = vcmask 261120
    %v244 = vsel %vm242, %v214, 0
    %v247 = vsel %vm242, %v215, 0
    %v250 = vsel %vm242, %v216, 0
    %v253 = vsel %vm242, %v217, 0
    %255 = vmatprep.subr.mxu0 0.0
    %256 = vmatpush1.msra.mxu0 %v210
    %257 = vmatprep.subr.mxu0 0.0
    %258 = vmatpush1.msra.mxu0 %v211
    %259 = vmatprep.subr.mxu0 0.0
    %260 = vmatpush1.msra.mxu0 %v212
    %261 = vmatprep.subr.mxu0 0.0
    %262 = vmatpush1.msra.mxu0 %v213
    %263 = vmatprep.subr.mxu0 0.0
    %264 = vmatpush1.msra.mxu0 0.0
    %265 = vmatprep.subr.mxu0 0.0
    %266 = vmatpush1.msra.mxu0 0.0
    %267 = vmatprep.subr.mxu0 0.0
    %268 = vmatpush1.msra.mxu0 0.0
    %269 = vmatprep.subr.mxu0 0.0
    %270 = vmatpush1.msra.mxu0 0.0
    %271 = vmatprep.subr.mxu0 0.0
    %272 = vmatpush1.msra.mxu0 0.0
    %273 = vmatprep.subr.mxu0 0.0
    %274 = vmatpush1.msra.mxu0 0.0
    %275 = vmatprep.subr.mxu0 0.0
    %276 = vmatpush1.msra.mxu0 0.0
    %277 = vmatprep.subr.mxu0 0.0
    %278 = vmatpush1.msra.mxu0 0.0
    %279 = vmatprep.subr.mxu0 0.0
    %280 = vmatpush1.msra.mxu0 0.0
    %281 = vmatprep.subr.mxu0 0.0
    %282 = vmatpush1.msra.mxu0 0.0
    %283 = vmatprep.subr.mxu0 0.0
    %284 = vmatpush1.msra.mxu0 0.0
    %285 = vmatprep.subr.mxu0 0.0
    %286 = vmatpush1.msra.mxu0 0.0
    %287 = vmatprep.subr.mxu0 0.0
    %288 = vmatpush1.msra.mxu0 0.0
    %289 = vmatprep.subr.mxu0 0.0
    %290 = vmatpush1.msra.mxu0 0.0
    %291 = vmatprep.subr.mxu0 0.0
    %292 = vmatpush1.msra.mxu0 0.0
    %293 = vmatprep.subr.mxu0 0.0
    %294 = vmatpush1.msra.mxu0 0.0
    %295 = vmatprep.subr.mxu0 0.0
    %296 = vmatpush1.msra.mxu0 0.0
    %297 = vmatprep.subr.mxu0 0.0
    %298 = vmatpush1.msra.mxu0 0.0
    %299 = vmatprep.subr.mxu0 0.0
    %300 = vmatpush1.msra.mxu0 0.0
    %301 = vmatprep.subr.mxu0 0.0
    %302 = vmatpush1.msra.mxu0 0.0
    %303 = vmatprep.subr.mxu0 0.0
    %304 = vmatpush1.msra.mxu0 0.0
    %305 = vmatprep.subr.mxu0 0.0
    %306 = vmatpush1.msra.mxu0 0.0
    %307 = vmatprep.subr.mxu0 0.0
    %308 = vmatpush1.msra.mxu0 0.0
    %309 = vmatprep.subr.mxu0 0.0
    %310 = vmatpush1.msra.mxu0 0.0
    %311 = vmatprep.subr.mxu0 0.0
    %312 = vmatpush1.msra.mxu0 0.0
    %313 = vmatprep.subr.mxu0 0.0
    %314 = vmatpush1.msra.mxu0 0.0
    %315 = vmatprep.subr.mxu0 0.0
    %316 = vmatpush1.msra.mxu0 0.0
    %317 = vmatprep.subr.mxu0 0.0
    %318 = vmatpush1.msra.mxu0 0.0
    %319 = vmatprep.mubr.f32.mxu0 0.0
    %320 = vmatmul.mubr.f32.gmra.mrb[0].mxu0 %v244
    %v321 = vpop.f32.mrb[0].mxu0
    %v322 = vadd.f32 %v225, %v321
    %v323 = vpop.f32.mrb[0].mxu0
    %324 = vmatprep.mubr.f32.mxu0 0.0
    %325 = vmatmul.mubr.f32.gmra.mrb[0].mxu0 %v247
    %v326 = vpop.f32.mrb[0].mxu0
    %v327 = vadd.f32 %v230, %v326
    %v328 = vpop.f32.mrb[0].mxu0
    %329 = vmatprep.mubr.f32.mxu0 0.0
    %330 = vmatmul.mubr.f32.gmra.mrb[0].mxu0 %v250
    %v331 = vpop.f32.mrb[0].mxu0
    %v332 = vadd.f32 %v235, %v331
    %v333 = vpop.f32.mrb[0].mxu0
    %334 = vmatprep.mubr.f32.mxu0 0.0
    %335 = vmatmul.mubr.f32.gmra.mrb[0].mxu0 %v253
    %v336 = vpop.f32.mrb[0].mxu0
    %v337 = vadd.f32 %v240, %v336
    %v338 = vpop.f32.mrb[0].mxu0
    %339 = vdwg.mxu0
    %v340 = vmax.f32 %v322, 0.0
    %v341 = vmax.f32 %v327, 0.0
    %v342 = vmax.f32 %v332, 0.0
    %v343 = vmax.f32 %v337, 0.0
    %v344 = vld [vmem:[#allocation8] sm:$0xff]
    %v345 = vld [vmem:[#allocation8 + $0x8] sm:$0xff]
    %v346 = vld [vmem:[#allocation8 + $0x10] sm:$0xff]
    %v347 = vld [vmem:[#allocation8 + $0x18] sm:$0xff]
    %349 = vset.pattern.permute.xlu0 0
    %350 = vperm.xlu0 %349, %v344
    %v351 = vpop.permute.xlu0 %350
    %354 = vset.pattern.permute.xlu0 0
    %355 = vperm.xlu0 %354, %v345
    %v356 = vpop.permute.xlu0 %355
    %359 = vset.pattern.permute.xlu0 0
    %360 = vperm.xlu0 %359, %v346
    %v361 = vpop.permute.xlu0 %360
    %364 = vset.pattern.permute.xlu0 0
    %365 = vperm.xlu0 %364, %v347
    %v366 = vpop.permute.xlu0 %365
    %v368 = vmul.f32 %v340, %v351
    %v369 = vmul.f32 %v341, %v356
    %v370 = vmul.f32 %v342, %v361
    %v371 = vmul.f32 %v343, %v366
    %v372 = vadd.f32 %v368, %v369
    %v373 = vadd.f32 %v372, %v370
    %v374 = vadd.f32 %v373, %v371
    %v375 = vrot.slane %v374, 4
    %v376 = vadd.f32 %v374, %v375
    %v377 = vrot.slane %v376, 2
    %v378 = vadd.f32 %v376, %v377
    %v379 = vrot.slane %v378, 1
    %v380 = vadd.f32 %v378, %v379
    %v381 = vld [vmem:[#allocation2] sm:$0x1]
    %383 = vset.pattern.permute.xlu0 0
    %384 = vperm.xlu0 %383, %v381
    %v385 = vpop.permute.xlu0 %384
    %v387 = vlaneseq
    %v388 = vshrl.u32 %v387, 7
    %v389 = vsub.s32 0, %v388
    %v390 = vrot.slane %v385, %v389
    %v391 = vadd.f32 %v380, %v390
    %392 = vst [vmem:[%s7] sm:$0x1] %v391
    // Predicated region
    $region46: #{_lambda_.1} parent=1 // pred_check
      _
    $region47: #{_lambda_.1} parent=1 // pred_check_branch
      %394 = sbr.rel (0) target = $region49
    $region48: #{_lambda_.1} parent=1 // pred_region
      _
    $region49: #{_lambda_.1} parent=1 // pred_fallthru
      _
    // Predicated region
    $region50: #{_lambda_.1} parent=1 // pred_check
      _
    $region51: #{_lambda_.1} parent=1 // pred_check_branch
      %396 = sbr.rel (0) target = $region53
    $region52: #{_lambda_.1} parent=1 // pred_region
      _
    $region53: #{_lambda_.1} parent=1 // pred_fallthru
      _
    %397 = vsyncpa [#allocation4], 1
    %398 = vsyncpa [#allocation6], 1
    %399 = vsyncpa [#allocation9], 1

</llo_original>
